<compile_context>
chip_gen: v7x
topology: tpu7x:2x2x1
jax: 0.10.0
libtpu: 0.0.40
codegen_flags: <defaults>
</compile_context>

<pallas_src>
import functools

import jax
import jax.numpy as jnp
from jax import lax
from jax.experimental import pallas as pl
from jax.experimental.pallas import tpu as pltpu


def _row_p_norm(d, p):
    """p-norm over the lane (embedding) axis, keepdims -> [TB, 1] float32."""
    if p == 1:
        return jnp.sum(jnp.abs(d), axis=1, keepdims=True)
    if p == 2:
        return jnp.sqrt(jnp.sum(d * d, axis=1, keepdims=True))
    if isinstance(p, int) and p > 2:
        # Integer powers via repeated VPU multiplies (avoid EUP pow on the
        # full [TB, D] tile); only the final 1/p pow touches [TB, 1].
        a = jnp.abs(d)
        acc = a
        for _ in range(p - 1):
            acc = acc * a
        return jnp.sum(acc, axis=1, keepdims=True) ** (1.0 / p)
    pf = float(p)
    return jnp.sum(jnp.abs(d) ** pf, axis=1, keepdims=True) ** (1.0 / pf)


def _transe_loss_kernel(head_ref, rel_ref, tail_ref, tail_corr_ref,
                        out_ref, acc_ref, *,
                        margin, norm_order, batch, tile_rows, need_mask):
    i = pl.program_id(0)

    @pl.when(i == 0)
    def _init():
        acc_ref[...] = jnp.zeros_like(acc_ref)

    h = head_ref[...].astype(jnp.float32)
    r = rel_ref[...].astype(jnp.float32)
    t = tail_ref[...].astype(jnp.float32)
    tc = tail_corr_ref[...].astype(jnp.float32)

    hr = h + r                                  # hoisted, shared by both distances
    n_pos = _row_p_norm(hr - t, norm_order)     # [TB, 1]
    n_neg = _row_p_norm(hr - tc, norm_order)    # [TB, 1]

    # MarginRankingLoss with target y = +1:
    #   loss_i = max(0, -y*(n_pos - n_neg) + margin) = max(0, n_neg - n_pos + margin)
    per_example = jnp.maximum(n_neg - n_pos + jnp.float32(margin), 0.0)

    if need_mask:  # last tile may run past the true batch size
        row = lax.broadcasted_iota(jnp.int32, per_example.shape, 0) + i * tile_rows
        per_example = jnp.where(row < batch, per_example, 0.0)

    acc_ref[...] += jnp.sum(per_example, axis=0, keepdims=True)

    @pl.when(i == pl.num_programs(0) - 1)
    def _finalize():
        out_ref[...] = acc_ref[...] * jnp.float32(1.0 / batch)


def _pick_tile_rows(batch, dim):
    # ~1 MiB per f32 input tile: 4 inputs x 2 pipeline buffers ~= 8 MiB of
    # VMEM, comfortably inside v5e's 16 MiB and v7x's 32 MiB scoped defaults.
    target_bytes = 1 * 1024 * 1024
    tb = target_bytes // (dim * 4)
    tb = max(8, min(512, (tb // 8) * 8))
    if batch <= tb:
        return batch               # full extent always satisfies the (8,128) rule
    return tb                      # multiple of 8


def transe_loss(triplet, corrupted_triplet, *, margin, norm_order=1):
    """triplet, corrupted_triplet: float arrays of shape [3, B, D]."""
    _, B, D = triplet.shape
    tb = _pick_tile_rows(B, D)
    n_tiles = pl.cdiv(B, tb)
    need_mask = (B % tb) != 0

    kernel = functools.partial(
        _transe_loss_kernel,
        margin=float(margin), norm_order=norm_order,
        batch=B, tile_rows=tb, need_mask=need_mask)

    # head/rel/tail/corrupted-tail are picked straight out of the [3, B, D]
    # HBM arrays by the BlockSpec index maps (leading dim squeezed).
    head_spec = pl.BlockSpec((None, tb, D), lambda i: (0, i, 0))
    rel_spec = pl.BlockSpec((None, tb, D), lambda i: (1, i, 0))
    tail_spec = pl.BlockSpec((None, tb, D), lambda i: (2, i, 0))
    corr_spec = pl.BlockSpec((None, tb, D), lambda i: (2, i, 0))

    out = pl.pallas_call(
        kernel,
        out_shape=jax.ShapeDtypeStruct((1, 1), jnp.float32),
        grid_spec=pltpu.PrefetchScalarGridSpec(
            num_scalar_prefetch=0,
            grid=(n_tiles,),
            in_specs=[head_spec, rel_spec, tail_spec, corr_spec],
            out_specs=pl.BlockSpec((1, 1), lambda i: (0, 0)),
            scratch_shapes=[pltpu.VMEM((1, 1), jnp.float32)],
        ),
        compiler_params=pltpu.CompilerParams(
            dimension_semantics=("arbitrary",)),   # batch axis is a reduction
    )(triplet, triplet, triplet, corrupted_triplet)
    # TODO(synk): on v7x, add a leading size-2 "parallel" grid axis with
    # per-core partial sums to exploit both TensorCores.
    return out[0, 0]


def _reference_loss(triplet, corrupted_triplet, margin, norm_order=1):
    head, rel, tail = triplet[0], triplet[1], triplet[2]
    tail_c = corrupted_triplet[2]
    p = float(norm_order)
    d_pos = jnp.sum(jnp.abs(head + rel - tail) ** p, axis=1) ** (1.0 / p)
    d_neg = jnp.sum(jnp.abs(head + rel - tail_c) ** p, axis=1) ** (1.0 / p)
    y = 1.0  # -(-1)
    return jnp.mean(jnp.maximum(-y * (d_pos - d_neg) + margin, 0.0))


if __name__ == "__main__":
    key = jax.random.PRNGKey(0)
    k1, k2 = jax.random.split(key)

    B, D = 8, 32          # small batch of (head, rel, tail) embeddings
    margin = 1.0

    triplet = jax.random.normal(k1, (3, B, D), dtype=jnp.float32)
    corrupted_triplet = jax.random.normal(k2, (3, B, D), dtype=jnp.float32)

    for norm_order in (1, 2):
        loss = transe_loss(triplet, corrupted_triplet,
                           margin=margin, norm_order=norm_order)
        loss = jax.block_until_ready(loss)
        ref = _reference_loss(triplet, corrupted_triplet, margin, norm_order)
        assert jnp.allclose(loss, ref, atol=1e-5, rtol=1e-5), (norm_order, loss, ref)

    print("KERNEL_OK")
</pallas_src>

<mosaic_0001>
module attributes {stable_mosaic.version = 11 : i64} {
  func.func @_transe_loss_kernel(%arg0: i32, %arg1: memref<1x8x32xf32, #tpu.memory_space<vmem>>, %arg2: memref<1x8x32xf32, #tpu.memory_space<vmem>>, %arg3: memref<1x8x32xf32, #tpu.memory_space<vmem>>, %arg4: memref<1x8x32xf32, #tpu.memory_space<vmem>>, %arg5: memref<1x1xf32, #tpu.memory_space<vmem>>, %arg6: memref<1x1xf32, #tpu.memory_space<vmem>>) attributes {dimension_semantics = [#tpu.dimension_semantics<arbitrary>], iteration_bounds = array<i64: 1>, scalar_prefetch = 0 : i64, scratch_operands = 1 : i64, tpu.core_type = #tpu.core_type<tc>, window_params = [{transform_indices = @transform_0, window_bounds = array<i64: 1, 8, 32>}, {transform_indices = @transform_1, window_bounds = array<i64: 1, 8, 32>}, {transform_indices = @transform_2, window_bounds = array<i64: 1, 8, 32>}, {transform_indices = @transform_3, window_bounds = array<i64: 1, 8, 32>}, {pipeline_mode = #tpu.pipeline_mode<synchronous>, transform_indices = @transform_4, window_bounds = array<i64: 1, 1>}]} {
    %c0_i32 = arith.constant 0 : i32
    %0 = arith.cmpi eq, %arg0, %c0_i32 : i32
    %1 = arith.extui %0 : i1 to i32
    %c0_i32_0 = arith.constant 0 : i32
    %2 = arith.cmpi ne, %1, %c0_i32_0 : i32
    scf.if %2 {
      %cst_22 = arith.constant 0.000000e+00 : f32
      %33 = vector.broadcast %cst_22 : f32 to vector<1x1xf32>
      %c0_23 = arith.constant 0 : index
      %c0_24 = arith.constant 0 : index
      %34 = vector.load %arg6[%c0_23, %c0_24] : memref<1x1xf32, #tpu.memory_space<vmem>>, vector<1x1xf32>
      tpu.vector_store %arg6[%c0_23, %c0_24], %33 {strides = array<i32>} : memref<1x1xf32, #tpu.memory_space<vmem>>, vector<1x1xf32>,
    } else {
    }
    %c0 = arith.constant 0 : index
    %c0_1 = arith.constant 0 : index
    %c0_2 = arith.constant 0 : index
    %3 = vector.load %arg1[%c0, %c0_1, %c0_2] : memref<1x8x32xf32, #tpu.memory_space<vmem>>, vector<1x8x32xf32>
    %4 = vector.shape_cast %3 : vector<1x8x32xf32> to vector<8x32xf32>
    %c0_3 = arith.constant 0 : index
    %c0_4 = arith.constant 0 : index
    %c0_5 = arith.constant 0 : index
    %5 = vector.load %arg2[%c0_3, %c0_4, %c0_5] : memref<1x8x32xf32, #tpu.memory_space<vmem>>, vector<1x8x32xf32>
    %6 = vector.shape_cast %5 : vector<1x8x32xf32> to vector<8x32xf32>
    %c0_6 = arith.constant 0 : index
    %c0_7 = arith.constant 0 : index
    %c0_8 = arith.constant 0 : index
    %7 = vector.load %arg3[%c0_6, %c0_7, %c0_8] : memref<1x8x32xf32, #tpu.memory_space<vmem>>, vector<1x8x32xf32>
    %8 = vector.shape_cast %7 : vector<1x8x32xf32> to vector<8x32xf32>
    %c0_9 = arith.constant 0 : index
    %c0_10 = arith.constant 0 : index
    %c0_11 = arith.constant 0 : index
    %9 = vector.load %arg4[%c0_9, %c0_10, %c0_11] : memref<1x8x32xf32, #tpu.memory_space<vmem>>, vector<1x8x32xf32>
    %10 = vector.shape_cast %9 : vector<1x8x32xf32> to vector<8x32xf32>
    %11 = arith.addf %4, %6 : vector<8x32xf32>
    %12 = arith.subf %11, %8 : vector<8x32xf32>
    %13 = math.absf %12 : vector<8x32xf32>
    %cst = arith.constant dense<0.000000e+00> : vector<8xf32>
    %14 = vector.multi_reduction <add>, %13, %cst [1] : vector<8x32xf32> to vector<8xf32>
    %15 = vector.shape_cast %14 : vector<8xf32> to vector<8x1xf32>
    %16 = arith.subf %11, %10 : vector<8x32xf32>
    %17 = math.absf %16 : vector<8x32xf32>
    %cst_12 = arith.constant dense<0.000000e+00> : vector<8xf32>
    %18 = vector.multi_reduction <add>, %17, %cst_12 [1] : vector<8x32xf32> to vector<8xf32>
    %19 = vector.shape_cast %18 : vector<8xf32> to vector<8x1xf32>
    %20 = arith.subf %19, %15 : vector<8x1xf32>
    %cst_13 = arith.constant 1.000000e+00 : f32
    %21 = vector.broadcast %cst_13 : f32 to vector<8x1xf32>
    %22 = arith.addf %20, %21 : vector<8x1xf32>
    %cst_14 = arith.constant 0.000000e+00 : f32
    %23 = vector.broadcast %cst_14 : f32 to vector<8x1xf32>
    %24 = arith.maximumf %22, %23 : vector<8x1xf32>
    %c0_15 = arith.constant 0 : index
    %c0_16 = arith.constant 0 : index
    %25 = vector.load %arg6[%c0_15, %c0_16] : memref<1x1xf32, #tpu.memory_space<vmem>>, vector<1x1xf32>
    %cst_17 = arith.constant dense<0.000000e+00> : vector<1xf32>
    %26 = vector.multi_reduction <add>, %24, %cst_17 [0] : vector<8x1xf32> to vector<1xf32>
    %27 = vector.shape_cast %26 : vector<1xf32> to vector<1x1xf32>
    %28 = arith.addf %25, %27 : vector<1x1xf32>
    %c0_18 = arith.constant 0 : index
    %c0_19 = arith.constant 0 : index
    %29 = vector.load %arg6[%c0_18, %c0_19] : memref<1x1xf32, #tpu.memory_space<vmem>>, vector<1x1xf32>
    tpu.vector_store %arg6[%c0_18, %c0_19], %28 {strides = array<i32>} : memref<1x1xf32, #tpu.memory_space<vmem>>, vector<1x1xf32>,
    %c0_i32_20 = arith.constant 0 : i32
    %30 = arith.cmpi eq, %arg0, %c0_i32_20 : i32
    %31 = arith.extui %30 : i1 to i32
    %c0_i32_21 = arith.constant 0 : i32
    %32 = arith.cmpi ne, %31, %c0_i32_21 : i32
    scf.if %32 {
      %c0_22 = arith.constant 0 : index
      %c0_23 = arith.constant 0 : index
      %33 = vector.load %arg6[%c0_22, %c0_23] : memref<1x1xf32, #tpu.memory_space<vmem>>, vector<1x1xf32>
      %cst_24 = arith.constant 1.250000e-01 : f32
      %34 = vector.broadcast %cst_24 : f32 to vector<1x1xf32>
      %35 = arith.mulf %33, %34 : vector<1x1xf32>
      %c0_25 = arith.constant 0 : index
      %c0_26 = arith.constant 0 : index
      %36 = vector.load %arg5[%c0_25, %c0_26] : memref<1x1xf32, #tpu.memory_space<vmem>>, vector<1x1xf32>
      tpu.vector_store %arg5[%c0_25, %c0_26], %35 {strides = array<i32>} : memref<1x1xf32, #tpu.memory_space<vmem>>, vector<1x1xf32>,
    } else {
    }
    return
  }
  func.func @transform_0(%arg0: i32) -> (i32, i32, i32) {
    %c0_i32 = arith.constant 0 : i32
    %c0_i32_0 = arith.constant 0 : i32
    %c0_i32_1 = arith.constant 0 : i32
    return %c0_i32, %arg0, %c0_i32_0 : i32, i32, i32
  }
  func.func @transform_1(%arg0: i32) -> (i32, i32, i32) {
    %c1_i32 = arith.constant 1 : i32
    %c0_i32 = arith.constant 0 : i32
    %c0_i32_0 = arith.constant 0 : i32
    return %c1_i32, %arg0, %c0_i32 : i32, i32, i32
  }
  func.func @transform_2(%arg0: i32) -> (i32, i32, i32) {
    %c2_i32 = arith.constant 2 : i32
    %c0_i32 = arith.constant 0 : i32
    %c0_i32_0 = arith.constant 0 : i32
    return %c2_i32, %arg0, %c0_i32 : i32, i32, i32
  }
  func.func @transform_3(%arg0: i32) -> (i32, i32, i32) {
    %c2_i32 = arith.constant 2 : i32
    %c0_i32 = arith.constant 0 : i32
    %c0_i32_0 = arith.constant 0 : i32
    return %c2_i32, %arg0, %c0_i32 : i32, i32, i32
  }
  func.func @transform_4(%arg0: i32) -> (i32, i32) {
    %c0_i32 = arith.constant 0 : i32
    %c0_i32_0 = arith.constant 0 : i32
    %c0_i32_1 = arith.constant 0 : i32
    return %c0_i32, %c0_i32_0 : i32, i32
  }
}

</mosaic_0001>

<llo_original>
// kernel: tpu_custom_call.1
$region0: #{tpu_custom_call.1}
  #allocation0 [shape = 'u32[]', space=smem, size = 0x4, offset = 0x4, fixed_abs, tag = 'smem constant byte address 0x4 - core index']
  #allocation1 [shape = 'u32[144,128]{1,0:T(1,128)}', space=vmem, size = 0x12000, scoped, tag = 'internal scratch']
  #allocation2 [shape = 'f32[1,1]{1,0:T(1,128)}', space=vmem, size = 0x200, scoped, tag = 'scratch operand']
  %s0 = inlined_call_operand.hbm [shape: f32[3,8,32], index: 0, kind: input, shape index: {}]
  %s1 = inlined_call_operand.hbm [shape: f32[3,8,32], index: 1, kind: input, shape index: {}]
  %s2 = inlined_call_operand.hbm [shape: f32[3,8,32], index: 2, kind: input, shape index: {}]
  %s3 = inlined_call_operand.hbm [shape: f32[3,8,32], index: 3, kind: input, shape index: {}]
  %s4 = inlined_call_operand.hbm [shape: f32[1,1], index: 4, kind: output, shape index: {}]
  %s5 = sld [smem:[#allocation0]]
  $region50: #{tpu_custom_call.1} parent=0
    _
  %s7 = ssub.s32 1, %s5
  %s8 = scalar_select 0, %s7, %s5
  $region1: #{tpu_custom_call.1} parent=0
    #allocation3 [shape = 'u8[4096]{0}', space=vmem, size = 0x1000, scoped, tag = 'input window, operand 0, single buffered']
    #allocation4 [shape = 's32[1]{0}', space=sflag, size = 0x4, scoped, tag = 'scoped memory for tpu_custom_call.1']
    #allocation5 [shape = 's32[1]{0}', space=sflag, size = 0x4, scoped, tag = 'scoped memory for tpu_custom_call.1']
    #allocation6 [shape = 'u8[4096]{0}', space=vmem, size = 0x1000, scoped, tag = 'input window, operand 1, single buffered']
    #allocation7 [shape = 's32[1]{0}', space=sflag, size = 0x4, scoped, tag = 'scoped memory for tpu_custom_call.1']
    #allocation8 [shape = 'u8[4096]{0}', space=vmem, size = 0x1000, scoped, tag = 'input window, operand 2, single buffered']
    #allocation9 [shape = 'u8[4096]{0}', space=vmem, size = 0x1000, scoped, tag = 'input window, operand 3, single buffered']
    #allocation10 [shape = 's32[1]{0}', space=sflag, size = 0x4, scoped, tag = 'scoped memory for tpu_custom_call.1']
    #allocation11 [shape = 'u8[512]{0}', space=vmem, size = 0x400, scoped, tag = 'output window, operand 0, single buffered']
    %9 = vsyncpa [#allocation4], 0
    %10 = vsyncpa [#allocation7], 0
    %11 = vsyncpa [#allocation10], 0
    %12 = vsyncpa [#allocation5], 0
    // Predicated region
    $region2: #{tpu_custom_call.1} parent=1 // pred_check
      _
    $region3: #{tpu_custom_call.1} parent=1 // pred_check_branch
      %14 = sbr.rel (0) target = $region5
    $region4: #{tpu_custom_call.1} parent=1 // pred_region
      %s16 = ssub.s32 128, 128
      %17 = vsyncadd [#allocation4], %s16
      %s19 = sshll.u32 [#allocation3], 4
      %s20 = int_to_ptr.vmem [resolvable:$true] %s19
      %22 = dma.hbm_to_vmem [thread:$0]  %s0, 128, %s20, [#allocation4]
    $region5: #{tpu_custom_call.1} parent=1 // pred_fallthru
      _
    // Predicated region
    $region6: #{tpu_custom_call.1} parent=1 // pred_check
      _
    $region7: #{tpu_custom_call.1} parent=1 // pred_check_branch
      %24 = sbr.rel (0) target = $region9
    $region8: #{tpu_custom_call.1} parent=1 // pred_region
      %s26 = ssub.s32 128, 128
      %27 = vsyncadd [#allocation7], %s26
      %s28 = scalar_lea.hbm %s1, 128
      %s30 = sshll.u32 [#allocation6], 4
      %s31 = int_to_ptr.vmem [resolvable:$true] %s30
      %33 = dma.hbm_to_vmem [thread:$0]  %s28, 128, %s31, [#allocation7]
    $region9: #{tpu_custom_call.1} parent=1 // pred_fallthru
      _
    // Predicated region
    $region10: #{tpu_custom_call.1} parent=1 // pred_check
      _
    $region11: #{tpu_custom_call.1} parent=1 // pred_check_branch
      %35 = sbr.rel (0) target = $region13
    $region12: #{tpu_custom_call.1} parent=1 // pred_region
      %s37 = ssub.s32 128, 128
      %38 = vsyncadd [#allocation7], %s37
      %s39 = scalar_lea.hbm %s2, 256
      %s41 = sshll.u32 [#allocation8], 4
      %s42 = int_to_ptr.vmem [resolvable:$true] %s41
      %44 = dma.hbm_to_vmem [thread:$0]  %s39, 128, %s42, [#allocation7]
    $region13: #{tpu_custom_call.1} parent=1 // pred_fallthru
      _
    // Predicated region
    $region14: #{tpu_custom_call.1} parent=1 // pred_check
      _
    $region15: #{tpu_custom_call.1} parent=1 // pred_check_branch
      %46 = sbr.rel (0) target = $region17
    $region16: #{tpu_custom_call.1} parent=1 // pred_region
      %s48 = ssub.s32 128, 128
      %49 = vsyncadd [#allocation10], %s48
      %s50 = scalar_lea.hbm %s3, 256
      %s52 = sshll.u32 [#allocation9], 4
      %s53 = int_to_ptr.vmem [resolvable:$true] %s52
      %55 = dma.hbm_to_vmem [thread:$0]  %s50, 128, %s53, [#allocation10]
    $region17: #{tpu_custom_call.1} parent=1 // pred_fallthru
      _
    // Predicated region
    $region18: #{tpu_custom_call.1} parent=1 // pred_check
      _
    $region19: #{tpu_custom_call.1} parent=1 // pred_check_branch
      %57 = sbr.rel (0) target = $region21
    $region20: #{tpu_custom_call.1} parent=1 // pred_region
      %58 = dma.done [#allocation4], 128
    $region21: #{tpu_custom_call.1} parent=1 // pred_fallthru
      _
    // Predicated region
    $region22: #{tpu_custom_call.1} parent=1 // pred_check
      _
    $region23: #{tpu_custom_call.1} parent=1 // pred_check_branch
      %60 = sbr.rel (0) target = $region25
    $region24: #{tpu_custom_call.1} parent=1 // pred_region
      %61 = dma.done [#allocation7], 128
    $region25: #{tpu_custom_call.1} parent=1 // pred_fallthru
      _
    // Predicated region
    $region26: #{tpu_custom_call.1} parent=1 // pred_check
      _
    $region27: #{tpu_custom_call.1} parent=1 // pred_check_branch
      %63 = sbr.rel (0) target = $region29
    $region28: #{tpu_custom_call.1} parent=1 // pred_region
      %64 = dma.done [#allocation7], 128
    $region29: #{tpu_custom_call.1} parent=1 // pred_fallthru
      _
    // Predicated region
    $region30: #{tpu_custom_call.1} parent=1 // pred_check
      _
    $region31: #{tpu_custom_call.1} parent=1 // pred_check_branch
      %66 = sbr.rel (0) target = $region33
    $region32: #{tpu_custom_call.1} parent=1 // pred_region
      %67 = dma.done [#allocation10], 128
    $region33: #{tpu_custom_call.1} parent=1 // pred_fallthru
      _
    %p68 = scmp.eq.s32.totalorder 0, 0
    // Predicated region
    $region34: #{tpu_custom_call.1} parent=1 // pred_check
      %p69 = pneg %p68
    $region35: #{tpu_custom_call.1} parent=1 // pred_check_branch
      %71 = sbr.rel (%p69) target = $region37
    $region36: #{tpu_custom_call.1} parent=1 // pred_region
      %vm72 = vcmask 0
      %73 = vst.msk [vmem:[#allocation2] sm:$0x1] %vm72, 0.0
    $region37: #{tpu_custom_call.1} parent=1 // pred_fallthru
      _
    %v74 = vld [vmem:[#allocation3] sm:$0xff]
    %v75 = vld [vmem:[#allocation6] sm:$0xff]
    %v76 = vld [vmem:[#allocation8] sm:$0xff]
    %v77 = vld [vmem:[#allocation9] sm:$0xff]
    %v78 = vadd.f32 %v74, %v75
    %v79 = vsub.f32 %v78, %v76
    %v80 = vand.u32 2147483647, %v79
    %vm81 = vcmask 261120
    %v82 = vsel %vm81, %v80, 0.0
    %83 = vadd.xlane.f32.xlu0 %v82
    %v84 = vpop.xlane.xlu0 %83
    %v85 = vsub.f32 %v78, %v77
    %v86 = vand.u32 2147483647, %v85
    %v87 = vsel %vm81, %v86, 0.0
    %88 = vadd.xlane.f32.xlu0 %v87
    %v89 = vpop.xlane.xlu0 %88
    %v90 = vsub.f32 %v89, %v84
    %v91 = vadd.f32 %v90, 1.0
    %v92 = vmax.f32 %v91, 0.0
    %v93 = vld [vmem:[#allocation2] sm:$0x1]
    %v94 = vrot.slane %v92, 4
    %v95 = vadd.f32 %v92, %v94
    %v96 = vrot.slane %v95, 2
    %v97 = vadd.f32 %v95, %v96
    %v98 = vrot.slane %v97, 1
    %v99 = vadd.f32 %v97, %v98
    %v100 = vadd.f32 %v93, %v99
    %vm101 = vcmask 0
    %102 = vst.msk [vmem:[#allocation2] sm:$0x1] %vm101, %v100
    // Predicated region
    $region38: #{tpu_custom_call.1} parent=1 // pred_check
      %p103 = pneg %p68
    $region39: #{tpu_custom_call.1} parent=1 // pred_check_branch
      %105 = sbr.rel (%p103) target = $region41
    $region40: #{tpu_custom_call.1} parent=1 // pred_region
      %v106 = vld [vmem:[#allocation2] sm:$0x1]
      %v107 = vmul.f32 %v106, 0.125
      %108 = vst.msk [vmem:[#allocation11] sm:$0x1] %vm101, %v107
    $region41: #{tpu_custom_call.1} parent=1 // pred_fallthru
      _
    // Predicated region
    $region42: #{tpu_custom_call.1} parent=1 // pred_check
      _
    $region43: #{tpu_custom_call.1} parent=1 // pred_check_branch
      %110 = sbr.rel (0) target = $region45
    $region44: #{tpu_custom_call.1} parent=1 // pred_region
      %s112 = ssub.s32 16, 16
      %113 = vsyncadd [#allocation5], %s112
      %s115 = sshll.u32 [#allocation11], 4
      %s116 = int_to_ptr.vmem [resolvable:$true] %s115
      %118 = dma.vmem_to_hbm [thread:$0]  %s116, 16, %s4, [#allocation5]
    $region45: #{tpu_custom_call.1} parent=1 // pred_fallthru
      _
    // Predicated region
    $region46: #{tpu_custom_call.1} parent=1 // pred_check
      _
    $region47: #{tpu_custom_call.1} parent=1 // pred_check_branch
      %120 = sbr.rel (0) target = $region49
    $region48: #{tpu_custom_call.1} parent=1 // pred_region
      %121 = dma.done [#allocation5], 16
    $region49: #{tpu_custom_call.1} parent=1 // pred_fallthru
      _
    %122 = vsyncpa [#allocation4], 1
    %123 = vsyncpa [#allocation7], 1
    %124 = vsyncpa [#allocation10], 1
    %125 = vsyncpa [#allocation5], 1

</llo_original>
